<compile_context>
chip_gen: v7x
topology: tpu7x:2x2x1
jax: 0.10.0
libtpu: 0.0.40
codegen_flags: <defaults>
</compile_context>

<pallas_src>
import functools

import jax
import jax.numpy as jnp
from jax import lax
from jax.experimental import pallas as pl
from jax.experimental.pallas import tpu as pltpu


def _round_up(v, m):
    return ((v + m - 1) // m) * m


def _vmem_limit_bytes():
    # Never request the full physical VMEM; leave slack for Mosaic internal scratch/semaphores.
    # 128 MiB parts (v5e/v6e) -> 100 MiB, 64 MiB parts (v7x) -> 56 MiB.
    phys = 64 << 20
    try:
        phys = int(getattr(pltpu.get_tpu_info(), "vmem_capacity_bytes", phys))
    except Exception:
        pass
    return int(max(32 << 20, min(phys - (8 << 20), 100 << 20)))


def _encoder_image_kernel(x_ref, w_ref, b_ref, o_ref, *, use_abs, no_imgnorm):
    """Resident-weight path: whole (img_dim, embed_size) bf16 weight lives in VMEM."""
    x = x_ref[...]
    if x.dtype != jnp.bfloat16:
        x = x.astype(jnp.bfloat16)  # only taken when the producer hands us f32
    # (TM, K) @ (K, E) on the MXU, f32 accumulation. Weight was pre-transposed at setup.
    feats = jnp.dot(x, w_ref[...], preferred_element_type=jnp.float32)
    feats = feats + b_ref[...]  # (1, embed_size) f32 bias broadcasts over rows
    if not no_imgnorm:
        # l2norm over dim=1: rsqrt on the EUP + one VPU multiply.
        # TODO(synk): no eps, matching the torch reference exactly (zero row -> NaN, as in torch).
        feats = feats * lax.rsqrt(jnp.sum(feats * feats, axis=1, keepdims=True))
    if use_abs:
        feats = jnp.abs(feats)
    o_ref[...] = feats.astype(o_ref.dtype)


def _encoder_image_kernel_ktiled(x_ref, w_ref, b_ref, o_ref, acc_ref, *, use_abs, no_imgnorm):
    """K-tiled fallback: weight streamed in (k_tile, embed_size) slabs, f32 VMEM accumulator."""
    k = pl.program_id(1)

    @pl.when(k == 0)
    def _():
        acc_ref[...] = jnp.zeros_like(acc_ref)

    x = x_ref[...]
    if x.dtype != jnp.bfloat16:
        x = x.astype(jnp.bfloat16)
    acc_ref[...] += jnp.dot(x, w_ref[...], preferred_element_type=jnp.float32)

    @pl.when(k == pl.num_programs(1) - 1)
    def _():
        feats = acc_ref[...] + b_ref[...]
        if not no_imgnorm:
            feats = feats * lax.rsqrt(jnp.sum(feats * feats, axis=1, keepdims=True))
        if use_abs:
            feats = jnp.abs(feats)
        o_ref[...] = feats.astype(o_ref.dtype)


def encoder_image_precomp(images, weight, bias, *, use_abs=False, no_imgnorm=False,
                          tm=512, k_tile=None, out_dtype=jnp.float32):
    """images: (N, img_dim) bf16 (preferred) or f32; weight: (embed_size, img_dim) torch layout;
    bias: (embed_size,)."""
    n, img_dim = images.shape
    embed_size, img_dim_w = weight.shape
    assert img_dim_w == img_dim, "weight must be (embed_size, img_dim) torch layout"

    # --- one-time setup (in a real model this is done once, not per forward) ---
    # bf16 weight (MXU-native, half resident VMEM), transposed to (img_dim, embed_size) so the
    # kernel contracts (TM,K)x(K,E) with no per-step transposed-operand handling.
    w_t = jnp.asarray(weight, jnp.bfloat16).T                 # (img_dim, embed_size)
    b2 = jnp.asarray(bias, jnp.float32).reshape(1, embed_size)

    # Row tile: big tiles amortize ~0.35us/step, but guarantee >= ~4 grid steps so megacore
    # sharding and DMA/compute pipelining always have work even at small/medium N.
    tm = max(16, min(int(tm), 512))
    tm = min(tm, _round_up(max(n // 4, 16), 16))
    grid_m = pl.cdiv(n, tm)  # no host-side pad; Pallas masks the partial last block.

    vmem_limit = _vmem_limit_bytes()

    # Decide whether the bf16 weight can stay fully VMEM-resident on this generation.
    w_bytes = img_dim * embed_size * 2
    if k_tile is None and w_bytes > vmem_limit // 2:
        for cand in (2048, 1024, 512, 256):
            if img_dim % cand == 0:
                k_tile = cand
                break
        # TODO(synk): if img_dim has no clean multiple-of-128 divisor, zero-pad K at setup
        # before enabling the K-tiled path; until then we fall through to the resident path.
    if k_tile is not None:
        assert img_dim % k_tile == 0, "k_tile must divide img_dim"

    x_bytes = jnp.dtype(images.dtype).itemsize
    cost = pl.CostEstimate(
        flops=2 * n * img_dim * embed_size,
        transcendentals=0 if no_imgnorm else n,  # one rsqrt per row
        bytes_accessed=int(n * img_dim * x_bytes            # x stream (bf16 or f32)
                           + w_bytes                         # resident / streamed bf16 weight
                           + embed_size * 4                  # bias
                           + n * embed_size * jnp.dtype(out_dtype).itemsize),
    )
    out_shape = jax.ShapeDtypeStruct((n, embed_size), out_dtype)

    def _call(single_buffer_resident):
        def resident_spec(shape, index_map):
            # Constant-index blocks: single buffer reclaims ~half the weight VMEM footprint.
            if single_buffer_resident:
                return pl.BlockSpec(shape, index_map, pipeline_mode=pl.Buffered(1))
            return pl.BlockSpec(shape, index_map)

        if k_tile is None:
            kernel = functools.partial(_encoder_image_kernel,
                                       use_abs=use_abs, no_imgnorm=no_imgnorm)
            grid_spec = pltpu.PrefetchScalarGridSpec(
                num_scalar_prefetch=0,
                grid=(grid_m,),
                in_specs=[
                    pl.BlockSpec((tm, img_dim), lambda i: (i, 0)),       # x row tile (pipelined)
                    resident_spec((img_dim, embed_size), lambda i: (0, 0)),  # weight: resident
                    resident_spec((1, embed_size), lambda i: (0, 0)),        # bias: resident
                ],
                out_specs=pl.BlockSpec((tm, embed_size), lambda i: (i, 0)),
            )
            dims = ("parallel",)
        else:
            kernel = functools.partial(_encoder_image_kernel_ktiled,
                                       use_abs=use_abs, no_imgnorm=no_imgnorm)
            grid_spec = pltpu.PrefetchScalarGridSpec(
                num_scalar_prefetch=0,
                grid=(grid_m, img_dim // k_tile),                        # reduction axis last
                in_specs=[
                    pl.BlockSpec((tm, k_tile), lambda i, k: (i, k)),
                    pl.BlockSpec((k_tile, embed_size), lambda i, k: (k, 0)),
                    resident_spec((1, embed_size), lambda i, k: (0, 0)),
                ],
                out_specs=pl.BlockSpec((tm, embed_size), lambda i, k: (i, 0)),
                scratch_shapes=[pltpu.VMEM((tm, embed_size), jnp.float32)],
            )
            dims = ("parallel", "arbitrary")

        return pl.pallas_call(
            kernel,
            out_shape=out_shape,
            grid_spec=grid_spec,
            compiler_params=pltpu.CompilerParams(
                dimension_semantics=dims,
                vmem_limit_bytes=vmem_limit,
            ),
            cost_estimate=cost,
        )(images, w_t, b2)

    try:
        return _call(True)
    except Exception:
        # Fallback if this jax build rejects single-buffered resident blocks.
        return _call(False)


def reference(images, weight, bias, *, use_abs=False, no_imgnorm=False):
    feats = images.astype(jnp.float32) @ weight.T + bias
    if not no_imgnorm:
        feats = feats / jnp.sqrt(jnp.sum(feats ** 2, axis=1, keepdims=True))
    if use_abs:
        feats = jnp.abs(feats)
    return feats


if __name__ == "__main__":
    # Small shapes consistent with the module. batch deliberately NOT a multiple of the row
    # tile so the masked partial-last-block path (no host pad/slice) is exercised; embed_size
    # is a multiple of 128 for a lane-dense output.
    batch = 40
    img_dim = 64
    embed_size = 128

    key = jax.random.PRNGKey(0)
    k_x, k_w = jax.random.split(key)

    # Simulate a bf16 producer for the activations (per perf review: feed x as bf16).
    images = jax.random.normal(k_x, (batch, img_dim), dtype=jnp.float32).astype(jnp.bfloat16)

    # Deterministic Xavier-uniform init matching init_weights():
    # r = sqrt(6) / sqrt(in_features + out_features); weight ~ U(-r, r); bias = 0.
    r = jnp.sqrt(6.0) / jnp.sqrt(float(img_dim + embed_size))
    weight = jax.random.uniform(
        k_w, (embed_size, img_dim), dtype=jnp.float32, minval=-r, maxval=r
    )
    bias = jnp.zeros((embed_size,), dtype=jnp.float32)

    # Default config (use_abs=False, no_imgnorm=False), resident-weight path.
    out = jax.block_until_ready(encoder_image_precomp(images, weight, bias))
    ref = reference(images, weight, bias)
    assert out.shape == (batch, embed_size)
    # bf16 matmul (f32 accumulation) -> loosened tolerance vs the all-f32 reference.
    assert jnp.allclose(out, ref, atol=2e-2, rtol=2e-2), "mismatch vs pure-JAX reference"

    # Exercise the other branches (use_abs=True, no_imgnorm=True).
    out2 = jax.block_until_ready(
        encoder_image_precomp(images, weight, bias, use_abs=True, no_imgnorm=True)
    )
    ref2 = reference(images, weight, bias, use_abs=True, no_imgnorm=True)
    assert jnp.allclose(out2, ref2, atol=2e-2, rtol=2e-2), "mismatch (use_abs/no_imgnorm)"

    # K-tiled fallback path (used when the resident weight would exceed the VMEM budget),
    # forced here at small shapes so it stays tested.
    img_dim_k = 256
    images_k = jax.random.normal(k_x, (batch, img_dim_k), dtype=jnp.float32).astype(jnp.bfloat16)
    weight_k = jax.random.uniform(
        k_w, (embed_size, img_dim_k), dtype=jnp.float32, minval=-r, maxval=r
    )
    out3 = jax.block_until_ready(
        encoder_image_precomp(images_k, weight_k, bias, k_tile=128)
    )
    ref3 = reference(images_k, weight_k, bias)
    assert jnp.allclose(out3, ref3, atol=2e-2, rtol=2e-2), "mismatch (K-tiled path)"

    print("KERNEL_OK")
</pallas_src>

<mosaic_0001>
module attributes {stable_mosaic.version = 11 : i64} {
  func.func @_encoder_image_kernel(%arg0: i32, %arg1: memref<16x64xbf16, #tpu.memory_space<vmem>>, %arg2: memref<64x128xbf16, #tpu.memory_space<vmem>>, %arg3: memref<1x128xf32, #tpu.memory_space<vmem>>, %arg4: memref<16x128xf32, #tpu.memory_space<vmem>>) attributes {dimension_semantics = [#tpu.dimension_semantics<parallel>], iteration_bounds = array<i64: 3>, scalar_prefetch = 0 : i64, scratch_operands = 0 : i64, tpu.core_type = #tpu.core_type<tc>, window_params = [{transform_indices = @transform_0, window_bounds = array<i64: 16, 64>}, {pipeline_mode = #tpu.pipeline_mode<synchronous>, transform_indices = @transform_1, window_bounds = array<i64: 64, 128>}, {pipeline_mode = #tpu.pipeline_mode<synchronous>, transform_indices = @transform_2, window_bounds = array<i64: 1, 128>}, {transform_indices = @transform_3, window_bounds = array<i64: 16, 128>}]} {
    %c0 = arith.constant 0 : index
    %c0_0 = arith.constant 0 : index
    %0 = vector.load %arg1[%c0, %c0_0] : memref<16x64xbf16, #tpu.memory_space<vmem>>, vector<16x64xbf16>
    %c0_1 = arith.constant 0 : index
    %c0_2 = arith.constant 0 : index
    %1 = vector.load %arg2[%c0_1, %c0_2] : memref<64x128xbf16, #tpu.memory_space<vmem>>, vector<64x128xbf16>
    %cst = arith.constant dense<0.000000e+00> : vector<16x128xf32>
    %2 = tpu.matmul %0, %1, %cst {dimension_numbers = #tpu.dot_dimension_numbers<[1], [0], [0], [1], [0, 0, 1, 1], [], []>} : vector<16x64xbf16>, vector<64x128xbf16>, vector<16x128xf32> -> vector<16x128xf32>
    %c0_3 = arith.constant 0 : index
    %c0_4 = arith.constant 0 : index
    %3 = vector.load %arg3[%c0_3, %c0_4] : memref<1x128xf32, #tpu.memory_space<vmem>>, vector<1x128xf32>
    %4 = vector.broadcast %3 : vector<1x128xf32> to vector<16x128xf32>
    %5 = arith.addf %2, %4 : vector<16x128xf32>
    %6 = arith.mulf %5, %5 : vector<16x128xf32>
    %cst_5 = arith.constant dense<0.000000e+00> : vector<16xf32>
    %7 = vector.multi_reduction <add>, %6, %cst_5 [1] : vector<16x128xf32> to vector<16xf32>
    %8 = vector.shape_cast %7 : vector<16xf32> to vector<16x1xf32>
    %9 = math.rsqrt %8 : vector<16x1xf32>
    %10 = vector.broadcast %9 : vector<16x1xf32> to vector<16x128xf32>
    %11 = arith.mulf %5, %10 : vector<16x128xf32>
    %c0_6 = arith.constant 0 : index
    %c0_7 = arith.constant 0 : index
    %12 = vector.load %arg4[%c0_6, %c0_7] : memref<16x128xf32, #tpu.memory_space<vmem>>, vector<16x128xf32>
    tpu.vector_store %arg4[%c0_6, %c0_7], %11 {strides = array<i32>} : memref<16x128xf32, #tpu.memory_space<vmem>>, vector<16x128xf32>,
    return
  }
  func.func @transform_0(%arg0: i32) -> (i32, i32) {
    %c0_i32 = arith.constant 0 : i32
    %c0_i32_0 = arith.constant 0 : i32
    return %arg0, %c0_i32 : i32, i32
  }
  func.func @transform_1(%arg0: i32) -> (i32, i32) {
    %c0_i32 = arith.constant 0 : i32
    %c0_i32_0 = arith.constant 0 : i32
    %c0_i32_1 = arith.constant 0 : i32
    return %c0_i32, %c0_i32_0 : i32, i32
  }
  func.func @transform_2(%arg0: i32) -> (i32, i32) {
    %c0_i32 = arith.constant 0 : i32
    %c0_i32_0 = arith.constant 0 : i32
    %c0_i32_1 = arith.constant 0 : i32
    return %c0_i32, %c0_i32_0 : i32, i32
  }
  func.func @transform_3(%arg0: i32) -> (i32, i32) {
    %c0_i32 = arith.constant 0 : i32
    %c0_i32_0 = arith.constant 0 : i32
    return %arg0, %c0_i32 : i32, i32
  }
}

module attributes {stable_mosaic.version = 11 : i64} {
  func.func @_encoder_image_kernel(%arg0: i32, %arg1: memref<16x64xbf16, #tpu.memory_space<vmem>>, %arg2: memref<64x128xbf16, #tpu.memory_space<vmem>>, %arg3: memref<1x128xf32, #tpu.memory_space<vmem>>, %arg4: memref<16x128xf32, #tpu.memory_space<vmem>>) attributes {dimension_semantics = [#tpu.dimension_semantics<parallel>], iteration_bounds = array<i64: 3>, scalar_prefetch = 0 : i64, scratch_operands = 0 : i64, tpu.core_type = #tpu.core_type<tc>, window_params = [{transform_indices = @transform_0, window_bounds = array<i64: 16, 64>}, {pipeline_mode = #tpu.pipeline_mode<synchronous>, transform_indices = @transform_1, window_bounds = array<i64: 64, 128>}, {pipeline_mode = #tpu.pipeline_mode<synchronous>, transform_indices = @transform_2, window_bounds = array<i64: 1, 128>}, {transform_indices = @transform_3, window_bounds = array<i64: 16, 128>}]} {
    %c0 = arith.constant 0 : index
    %c0_0 = arith.constant 0 : index
    %0 = vector.load %arg1[%c0, %c0_0] : memref<16x64xbf16, #tpu.memory_space<vmem>>, vector<16x64xbf16>
    %c0_1 = arith.constant 0 : index
    %c0_2 = arith.constant 0 : index
    %1 = vector.load %arg2[%c0_1, %c0_2] : memref<64x128xbf16, #tpu.memory_space<vmem>>, vector<64x128xbf16>
    %cst = arith.constant dense<0.000000e+00> : vector<16x128xf32>
    %2 = tpu.matmul %0, %1, %cst {dimension_numbers = #tpu.dot_dimension_numbers<[1], [0], [0], [1], [0, 0, 1, 1], [], []>} : vector<16x64xbf16>, vector<64x128xbf16>, vector<16x128xf32> -> vector<16x128xf32>
    %c0_3 = arith.constant 0 : index
    %c0_4 = arith.constant 0 : index
    %3 = vector.load %arg3[%c0_3, %c0_4] : memref<1x128xf32, #tpu.memory_space<vmem>>, vector<1x128xf32>
    %4 = vector.broadcast %3 : vector<1x128xf32> to vector<16x128xf32>
    %5 = arith.addf %2, %4 : vector<16x128xf32>
    %6 = arith.mulf %5, %5 : vector<16x128xf32>
    %cst_5 = arith.constant dense<0.000000e+00> : vector<16xf32>
    %7 = vector.multi_reduction <add>, %6, %cst_5 [1] : vector<16x128xf32> to vector<16xf32>
    %8 = vector.shape_cast %7 : vector<16xf32> to vector<16x1xf32>
    %9 = math.rsqrt %8 : vector<16x1xf32>
    %10 = vector.broadcast %9 : vector<16x1xf32> to vector<16x128xf32>
    %11 = arith.mulf %5, %10 : vector<16x128xf32>
    %c0_6 = arith.constant 0 : index
    %c0_7 = arith.constant 0 : index
    %12 = vector.load %arg4[%c0_6, %c0_7] : memref<16x128xf32, #tpu.memory_space<vmem>>, vector<16x128xf32>
    tpu.vector_store %arg4[%c0_6, %c0_7], %11 {strides = array<i32>} : memref<16x128xf32, #tpu.memory_space<vmem>>, vector<16x128xf32>,
    return
  }
  func.func @transform_0(%arg0: i32) -> (i32, i32) {
    %c0_i32 = arith.constant 0 : i32
    %c0_i32_0 = arith.constant 0 : i32
    return %arg0, %c0_i32 : i32, i32
  }
  func.func @transform_1(%arg0: i32) -> (i32, i32) {
    %c0_i32 = arith.constant 0 : i32
    %c0_i32_0 = arith.constant 0 : i32
    %c0_i32_1 = arith.constant 0 : i32
    return %c0_i32, %c0_i32_0 : i32, i32
  }
  func.func @transform_2(%arg0: i32) -> (i32, i32) {
    %c0_i32 = arith.constant 0 : i32
    %c0_i32_0 = arith.constant 0 : i32
    %c0_i32_1 = arith.constant 0 : i32
    return %c0_i32, %c0_i32_0 : i32, i32
  }
  func.func @transform_3(%arg0: i32) -> (i32, i32) {
    %c0_i32 = arith.constant 0 : i32
    %c0_i32_0 = arith.constant 0 : i32
    return %arg0, %c0_i32 : i32, i32
  }
}

</mosaic_0001>

<llo_original>
// kernel: tpu_custom_call.1
$region0: #{tpu_custom_call.1}
  #allocation0 [shape = 'u32[]', space=smem, size = 0x4, offset = 0x4, fixed_abs, tag = 'smem constant byte address 0x4 - core index']
  #allocation1 [shape = 'u32[144,128]{1,0:T(1,128)}', space=vmem, size = 0x12000, scoped, tag = 'internal scratch']
  %s0 = inlined_call_operand.hbm [shape: bf16[40,64], index: 0, kind: input, shape index: {}]
  %s1 = inlined_call_operand.hbm [shape: bf16[64,128], index: 1, kind: input, shape index: {}]
  %s2 = inlined_call_operand.vmem [shape: f32[1,128], index: 2, kind: input, shape index: {}]
  %s3 = inlined_call_operand.hbm [shape: f32[40,128], index: 3, kind: output, shape index: {}]
  %s4 = sld [smem:[#allocation0]]
  $region53: #{tpu_custom_call.1} parent=0
    _
  %s6 = ssub.s32 1, %s4
  %s7 = scalar_select 0, %s6, %s4
  $region1: #{tpu_custom_call.1} parent=0
    #allocation2 [shape = 'u8[8192]{0}', space=vmem, size = 0x2000, scoped, tag = 'input window, operand 0']
    #allocation3 [shape = 's32[2]{0}', space=sflag, size = 0x8, scoped, tag = 'scoped memory for tpu_custom_call.1']
    #allocation4 [shape = 's32[2]{0}', space=sflag, size = 0x8, scoped, tag = 'scoped memory for tpu_custom_call.1']
    #allocation5 [shape = 'u8[16384]{0}', space=vmem, size = 0x4000, scoped, tag = 'input window, operand 1, single buffered']
    #allocation6 [shape = 's32[1]{0}', space=sflag, size = 0x4, scoped, tag = 'scoped memory for tpu_custom_call.1']
    #allocation7 [shape = 'u8[16384]{0}', space=vmem, size = 0x4000, scoped, tag = 'output window, operand 0']
    %8 = vsyncpa [#allocation3], 0
    %s9 = scalar_lea.sflag [#allocation3], 1
    %10 = vsyncpa %s9, 0
    %11 = vsyncpa [#allocation6], 0
    %12 = vsyncpa [#allocation4], 0
    %s13 = scalar_lea.sflag [#allocation4], 1
    %14 = vsyncpa %s13, 0
    loop: start=0, step=1, limit=5
    $region2: #{tpu_custom_call.1} parent=1 // loop_pre_header
      _
    $region3: #{tpu_custom_call.1} parent=1 // loop_header
      %s16 = sphi 0, %s20
      %p17 = scmp.ge.s32.totalorder %s16, 5
      %s26 = sphi 0, %s28
      %s29 = sphi 0, %s26
      %s30 = sphi 0, %s29
      %s46 = sphi 0, %s30
      %s50 = sphi 0, %s50
      %s52 = sphi 0, %s50
      %s53 = sphi 0, %s52
      %s67 = sphi 0, %s53
      %s71 = sphi 0, %s71
      %s73 = sphi 0, %s71
      %s74 = sphi 0, %s73
      %s88 = sphi 0, %s74
      %s94 = sphi 0, %s96
      %s97 = sphi 0, %s94
      %s98 = sphi 0, %s97
      %s114 = sphi 0, %s98
    $region4: #{tpu_custom_call.1} parent=1 // loop_header_branch
      %19 = sbr.rel (%p17) target = $region8
    $region5: #{tpu_custom_call.1} parent=1 // loop_body
      %s21 = ssub.s32 %s16, 1
      %s22 = ssub.s32 %s16, 2
      %s23 = sadd.s32 %s16, 1
      %s24 = ssub.s32 %s16, %s23
      %p25 = scmp.eq.s32.totalorder %s24, 0
      %s27 = sadd.s32 %s26, 1
      %s28 = scalar_select %p25, %s26, %s27
      %p31 = pneg %p25
      %p32 = scmp.eq.s32.totalorder %s16, 2
      %p33 = por %p31, %p32
      %p34 = scmp.ne.s32.totalorder %s26, %s29
      %p35 = scmp.eq.s32.totalorder %s16, 0
      %p36 = por %p34, %p35
      %p37 = scmp.ne.s32.totalorder %s26, %s29
      %p38 = scmp.eq.s32.totalorder %s21, 2
      %p39 = por %p37, %p38
      %p40 = scmp.ne.s32.totalorder %s29, %s30
      %p41 = scmp.eq.s32.totalorder %s21, 0
      %p42 = por %p40, %p41
      %p43 = scmp.ne.s32.totalorder %s29, %s30
      %p44 = scmp.eq.s32.totalorder %s22, 2
      %p45 = por %p43, %p44
      %p47 = scmp.ne.s32.totalorder %s30, %s46
      %p48 = scmp.eq.s32.totalorder %s22, 0
      %p49 = por %p47, %p48
      %s51 = sadd.s32 %s50, 1
      %p54 = scmp.eq.s32.totalorder %s16, 2
      %p55 = scmp.ne.s32.totalorder %s50, %s52
      %p56 = scmp.eq.s32.totalorder %s16, 0
      %p57 = por %p55, %p56
      %p58 = scmp.ne.s32.totalorder %s50, %s52
      %p59 = scmp.eq.s32.totalorder %s21, 2
      %p60 = por %p58, %p59
      %p61 = scmp.ne.s32.totalorder %s52, %s53
      %p62 = scmp.eq.s32.totalorder %s21, 0
      %p63 = por %p61, %p62
      %p64 = scmp.ne.s32.totalorder %s52, %s53
      %p65 = scmp.eq.s32.totalorder %s22, 2
      %p66 = por %p64, %p65
      %p68 = scmp.ne.s32.totalorder %s53, %s67
      %p69 = scmp.eq.s32.totalorder %s22, 0
      %p70 = por %p68, %p69
      %s72 = sadd.s32 %s71, 1
      %p75 = scmp.eq.s32.totalorder %s16, 2
      %p76 = scmp.ne.s32.totalorder %s71, %s73
      %p77 = scmp.eq.s32.totalorder %s16, 0
      %p78 = por %p76, %p77
      %p79 = scmp.ne.s32.totalorder %s71, %s73
      %p80 = scmp.eq.s32.totalorder %s21, 2
      %p81 = por %p79, %p80
      %p82 = scmp.ne.s32.totalorder %s73, %s74
      %p83 = scmp.eq.s32.totalorder %s21, 0
      %p84 = por %p82, %p83
      %p85 = scmp.ne.s32.totalorder %s73, %s74
      %p86 = scmp.eq.s32.totalorder %s22, 2
      %p87 = por %p85, %p86
      %p89 = scmp.ne.s32.totalorder %s74, %s88
      %p90 = scmp.eq.s32.totalorder %s22, 0
      %p91 = por %p89, %p90
      %s92 = ssub.s32 %s16, %s23
      %p93 = scmp.eq.s32.totalorder %s92, 0
      %s95 = sadd.s32 %s94, 1
      %s96 = scalar_select %p93, %s94, %s95
      %p99 = pneg %p93
      %p100 = scmp.eq.s32.totalorder %s16, 2
      %p101 = por %p99, %p100
      %p102 = scmp.ne.s32.totalorder %s94, %s97
      %p103 = scmp.eq.s32.totalorder %s16, 0
      %p104 = por %p102, %p103
      %p105 = scmp.ne.s32.totalorder %s94, %s97
      %p106 = scmp.eq.s32.totalorder %s21, 2
      %p107 = por %p105, %p106
      %p108 = scmp.ne.s32.totalorder %s97, %s98
      %p109 = scmp.eq.s32.totalorder %s21, 0
      %p110 = por %p108, %p109
      %p111 = scmp.ne.s32.totalorder %s97, %s98
      %p112 = scmp.eq.s32.totalorder %s22, 2
      %p113 = por %p111, %p112
      %p115 = scmp.ne.s32.totalorder %s98, %s114
      %p116 = scmp.eq.s32.totalorder %s22, 0
      %p117 = por %p115, %p116
      %p118 = scmp.le.s32.totalorder 1, %s16
      %p119 = scmp.lt.s32.totalorder %s16, 4
      %p120 = pnand %p118, %p119
      %p121 = pneg %p120
      // Predicated region
      $region9: #{tpu_custom_call.1} parent=5 // pred_check
        _
      $region10: #{tpu_custom_call.1} parent=5 // pred_check_branch
        %123 = sbr.rel (%p120) target = $region12
      $region11: #{tpu_custom_call.1} parent=5 // pred_region
        %s124 = ssub.s32 %s16, 1
        // Predicated region
        $region13: #{tpu_custom_call.1} parent=11 // pred_check
          %p125 = pneg %p63
        $region14: #{tpu_custom_call.1} parent=11 // pred_check_branch
          %127 = sbr.rel (%p125) target = $region16
        $region15: #{tpu_custom_call.1} parent=11 // pred_region
          %s129 = ssub.s32 512, 512
          %130 = vsyncadd [#allocation6], %s129
          %s131 = sshll.u32 [#allocation5], 4
          %s132 = int_to_ptr.vmem [resolvable:$true] %s131
          %137 = dma.hbm_to_vmem [thread:$0]  %s1, 512, %s132, [#allocation6], 64, 64, 4
        $region16: #{tpu_custom_call.1} parent=11 // pred_fallthru
          _
        // Predicated region
        $region17: #{tpu_custom_call.1} parent=11 // pred_check
          %p138 = pneg %p84
        $region18: #{tpu_custom_call.1} parent=11 // pred_check_branch
          %140 = sbr.rel (%p138) target = $region20
        $region19: #{tpu_custom_call.1} parent=11 // pred_region
          _
        $region20: #{tpu_custom_call.1} parent=11 // pred_fallthru
          _
      $region12: #{tpu_custom_call.1} parent=5 // pred_fallthru
        _
      %p141 = scmp.lt.s32.totalorder %s16, 3
      // Predicated region
      $region21: #{tpu_custom_call.1} parent=5 // pred_check
        %p142 = pneg %p141
      $region22: #{tpu_custom_call.1} parent=5 // pred_check_branch
        %144 = sbr.rel (%p142) target = $region24
      $region23: #{tpu_custom_call.1} parent=5 // pred_region
        // Predicated region
        $region25: #{tpu_custom_call.1} parent=23 // pred_check
          %p145 = pneg %p36
        $region26: #{tpu_custom_call.1} parent=23 // pred_check_branch
          %147 = sbr.rel (%p145) target = $region28
        $region27: #{tpu_custom_call.1} parent=23 // pred_region
          %s148 = sand.u32 %s26, 1
          %s149 = scalar_lea.sflag [#allocation3], %s148
          %s150 = sand.u32 %s26, 1
          %s151 = smul.addr %s150, 8
          %s152 = scalar_lea.vmem [#allocation2], %s151
          %s153 = smul.u32 2, %s16
          %s154 = ssub.s32 5, %s153
          %p155 = scmp.lt.s32.totalorder %s154, 2
          %s156 = scalar_select %p155, %s154, 2
          %s157 = smul.u32 64, %s156
          %s159 = ssub.s32 128, %s157
          %160 = vsyncadd %s149, %s159
          %p161 = scmp.ne.s32.totalorder 0, %s157
          %s162 = smul.addr %s153, 64
          %s163 = scalar_lea.hbm %s0, %s162
          %s164 = smul.u32 4, %s156
          %s165 = sshll.u32 %s152, 4
          %s166 = int_to_ptr.vmem [resolvable:$true] %s165
          %s167 = sshll.u32 %s164, 4
          %171 = dma.hbm_to_vmem [thread:$0]  (%p161), %s163, %s167, %s166, %s149, 64, 64, 4
        $region28: #{tpu_custom_call.1} parent=23 // pred_fallthru
          _
      $region24: #{tpu_custom_call.1} parent=5 // pred_fallthru
        _
      %p172 = scmp.le.s32.totalorder 1, %s16
      %p173 = scmp.lt.s32.totalorder %s16, 4
      %p174 = pnand %p172, %p173
      %p175 = pneg %p174
      // Predicated region
      $region29: #{tpu_custom_call.1} parent=5 // pred_check
        _
      $region30: #{tpu_custom_call.1} parent=5 // pred_check_branch
        %177 = sbr.rel (%p174) target = $region32
      $region31: #{tpu_custom_call.1} parent=5 // pred_region
        %s178 = ssub.s32 %s16, 1
        %s179 = sand.u32 %s29, 1
        %s180 = scalar_lea.sflag [#allocation3], %s179
        %s181 = sand.u32 %s29, 1
        %s182 = smul.addr %s181, 8
        %s183 = scalar_lea.vmem [#allocation2], %s182
        // Predicated region
        $region33: #{tpu_custom_call.1} parent=31 // pred_check
          %p184 = pneg %p42
        $region34: #{tpu_custom_call.1} parent=31 // pred_check_branch
          %186 = sbr.rel (%p184) target = $region36
        $region35: #{tpu_custom_call.1} parent=31 // pred_region
          %187 = dma.done %s180, 128
        $region36: #{tpu_custom_call.1} parent=31 // pred_fallthru
          _
        // Predicated region
        $region37: #{tpu_custom_call.1} parent=31 // pred_check
          %p188 = pneg %p63
        $region38: #{tpu_custom_call.1} parent=31 // pred_check_branch
          %190 = sbr.rel (%p188) target = $region40
        $region39: #{tpu_custom_call.1} parent=31 // pred_region
          %191 = dma.done [#allocation6], 512
        $region40: #{tpu_custom_call.1} parent=31 // pred_fallthru
          _
        %s192 = sand.u32 %s29, 1
        %s193 = scalar_lea.sflag [#allocation3], %s192
        %s194 = sand.u32 %s29, 1
        %s195 = smul.addr %s194, 8
        %s196 = scalar_lea.vmem [#allocation2], %s195
        %p197 = pneg %p42
        %p198 = pneg %p39
        %p199 = pneg %p63
        %p200 = pneg %p60
        %p201 = pneg %p84
        %p202 = pneg %p81
        %p203 = pneg %p110
        %p204 = pneg %p107
        %s205 = sand.u32 %s97, 1
        %s206 = scalar_lea.sflag [#allocation4], %s205
        %s207 = sand.u32 %s97, 1
        %s208 = smul.addr %s207, 16
        %s209 = scalar_lea.vmem [#allocation7], %s208
        %s210 = smul.u32 2, %s21
        %s211 = ssub.s32 5, %s210
        %p212 = scmp.lt.s32.totalorder %s211, 2
        %s213 = scalar_select %p212, %s211, 2
        %s214 = smul.u32 64, %s213
        %s215 = smul.u32 2, %s21
        %s216 = ssub.s32 5, %s215
        %p217 = scmp.lt.s32.totalorder %s216, 2
        %s218 = scalar_select %p217, %s216, 2
        %s219 = smul.u32 128, %s218
        %v221 = vld [vmem:[%s183] sm:$0xf]
        %v222 = vld [vmem:[%s183 + $0x4] sm:$0xf]
        %v223 = vld [vmem:[#allocation5] sm:$0xf]
        %v224 = vld [vmem:[#allocation5 + $0x4] sm:$0xf]
        %v225 = vld [vmem:[#allocation5 + $0x8] sm:$0xf]
        %v226 = vld [vmem:[#allocation5 + $0xc] sm:$0xf]
        %v227 = vld [vmem:[#allocation5 + $0x10] sm:$0xf]
        %v228 = vld [vmem:[#allocation5 + $0x14] sm:$0xf]
        %v229 = vld [vmem:[#allocation5 + $0x18] sm:$0xf]
        %v230 = vld [vmem:[#allocation5 + $0x1c] sm:$0xf]
        %v231 = vld [vmem:[%s2] sm:$0x1]
        %v233 = vlaneseq
        %v234 = vshrl.u32 %v233, 7
        %v235 = vsub.s32 0, %v234
        %v236 = vrot.slane %v231, %v235
        %v240 = vunpack.c.l.b16 %v221
        %v241 = vunpack.c.l.b16 %v222
        %v242 = vpack.c.b16 %v241, %v240
        %v251 = vunpack.c.l.b16 %v223
        %v252 = vunpack.c.l.b16 %v224
        %v253 = vunpack.c.l.b16 %v225
        %v254 = vunpack.c.l.b16 %v226
        %v255 = vunpack.c.l.b16 %v227
        %v256 = vunpack.c.l.b16 %v228
        %v257 = vunpack.c.l.b16 %v229
        %v258 = vunpack.c.l.b16 %v230
        %v259 = vpack.c.b16 %v252, %v251
        %v260 = vpack.c.b16 %v254, %v253
        %v261 = vpack.c.b16 %v256, %v255
        %v262 = vpack.c.b16 %v258, %v257
        %vm267 = vcmask 523264
        %v269 = vsel %vm267, %v242, 0
        %271 = vmatprep.subr.bf16.mxu0 0
        %272 = vmatpush1.bf16.msra.mxu0 %v259
        %273 = vmatprep.subr.bf16.mxu0 0
        %274 = vmatpush1.bf16.msra.mxu0 %v260
        %275 = vmatprep.subr.bf16.mxu0 0
        %276 = vmatpush1.bf16.msra.mxu0 %v261
        %277 = vmatprep.subr.bf16.mxu0 0
        %278 = vmatpush1.bf16.msra.mxu0 %v262
        %279 = vmatprep.subr.bf16.mxu0 0
        %280 = vmatpush1.bf16.msra.mxu0 0
        %281 = vmatprep.subr.bf16.mxu0 0
        %282 = vmatpush1.bf16.msra.mxu0 0
        %283 = vmatprep.subr.bf16.mxu0 0
        %284 = vmatpush1.bf16.msra.mxu0 0
        %285 = vmatprep.subr.bf16.mxu0 0
        %286 = vmatpush1.bf16.msra.mxu0 0
        %287 = vmatprep.subr.bf16.mxu0 0
        %288 = vmatpush1.bf16.msra.mxu0 0
        %289 = vmatprep.subr.bf16.mxu0 0
        %290 = vmatpush1.bf16.msra.mxu0 0
        %291 = vmatprep.subr.bf16.mxu0 0
        %292 = vmatpush1.bf16.msra.mxu0 0
        %293 = vmatprep.subr.bf16.mxu0 0
        %294 = vmatpush1.bf16.msra.mxu0 0
        %295 = vmatprep.subr.bf16.mxu0 0
        %296 = vmatpush1.bf16.msra.mxu0 0
        %297 = vmatprep.subr.bf16.mxu0 0
        %298 = vmatpush1.bf16.msra.mxu0 0
        %299 = vmatprep.subr.bf16.mxu0 0
        %300 = vmatpush1.bf16.msra.mxu0 0
        %301 = vmatprep.subr.bf16.mxu0 0
        %302 = vmatpush1.bf16.msra.mxu0 0
        %303 = vmatprep.mubr.bf16.mxu0 0
        %304 = vmatmul.mubr.bf16.gmra.mrb[0].mxu0 %v269
        %v305 = vpop.f32.mrb[0].mxu0
        %v306 = vadd.f32 %v236, %v305
        %v307 = vpop.f32.mrb[0].mxu0
        %v308 = vpop.f32.mrb[0].mxu0
        %v309 = vadd.f32 %v236, %v308
        %v310 = vpop.f32.mrb[0].mxu0
        %311 = vdwg.mxu0
        %v312 = vmul.f32 %v306, %v306
        %v313 = vmul.f32 %v309, %v309
        %314 = vadd.xlane.f32.xlu0 %v312
        %v315 = vpop.xlane.xlu0 %314
        %316 = vadd.xlane.f32.xlu0 %v313
        %v317 = vpop.xlane.xlu0 %316
        %v318 = vrsqrt.pop %v315
        %v319 = vrsqrt.pop %v317
        %v320 = vmul.f32 %v306, %v318
        %v321 = vmul.f32 %v309, %v319
        %322 = vst [vmem:[%s209] sm:$0xff] %v320
        %323 = vst [vmem:[%s209 + $0x8] sm:$0xff] %v321
        %s324 = sand.u32 %s97, 1
        %s325 = scalar_lea.sflag [#allocation4], %s324
        %s326 = sand.u32 %s97, 1
        %s327 = smul.addr %s326, 16
        %s328 = scalar_lea.vmem [#allocation7], %s327
        // Predicated region
        $region41: #{tpu_custom_call.1} parent=31 // pred_check
          %p329 = pneg %p107
        $region42: #{tpu_custom_call.1} parent=31 // pred_check_branch
          %331 = sbr.rel (%p329) target = $region44
        $region43: #{tpu_custom_call.1} parent=31 // pred_region
          %s332 = smul.u32 2, %s21
          %s333 = ssub.s32 5, %s332
          %p334 = scmp.lt.s32.totalorder %s333, 2
          %s335 = scalar_select %p334, %s333, 2
          %s336 = smul.u32 128, %s335
          %s338 = ssub.s32 256, %s336
          %339 = vsyncadd %s325, %s338
          %p340 = scmp.ne.s32.totalorder 0, %s336
          %s341 = smul.addr %s332, 128
          %s342 = scalar_lea.hbm %s3, %s341
          %s343 = smul.u32 8, %s335
          %s344 = sshll.u32 %s328, 4
          %s345 = int_to_ptr.vmem [resolvable:$true] %s344
          %s346 = sshll.u32 %s343, 4
          %350 = dma.vmem_to_hbm [thread:$0]  (%p340), %s345, %s346, %s342, %s325, 128, 128, 8
        $region44: #{tpu_custom_call.1} parent=31 // pred_fallthru
          _
      $region32: #{tpu_custom_call.1} parent=5 // pred_fallthru
        _
      %p351 = scmp.le.s32.totalorder 2, %s16
      // Predicated region
      $region45: #{tpu_custom_call.1} parent=5 // pred_check
        %p352 = pneg %p351
      $region46: #{tpu_custom_call.1} parent=5 // pred_check_branch
        %354 = sbr.rel (%p352) target = $region48
      $region47: #{tpu_custom_call.1} parent=5 // pred_region
        %s355 = ssub.s32 %s16, 2
        // Predicated region
        $region49: #{tpu_custom_call.1} parent=47 // pred_check
          %p356 = pneg %p113
        $region50: #{tpu_custom_call.1} parent=47 // pred_check_branch
          %358 = sbr.rel (%p356) target = $region52
        $region51: #{tpu_custom_call.1} parent=47 // pred_region
          %s359 = sand.u32 %s98, 1
          %s360 = scalar_lea.sflag [#allocation4], %s359
          %s361 = sand.u32 %s98, 1
          %s362 = smul.addr %s361, 16
          %s363 = scalar_lea.vmem [#allocation7], %s362
          %364 = dma.done %s360, 256
        $region52: #{tpu_custom_call.1} parent=47 // pred_fallthru
          _
      $region48: #{tpu_custom_call.1} parent=5 // pred_fallthru
        _
    $region6: #{tpu_custom_call.1} parent=1 // loop_footer
      %s20 = sadd.s32 1, %s16
    $region7: #{tpu_custom_call.1} parent=1 // loop_footer_branch
      %15 = sbr.rel target = $region3
    $region8: #{tpu_custom_call.1} parent=1 // loop_exit
      _
    %365 = vsyncpa [#allocation3], 1
    %s366 = scalar_lea.sflag [#allocation3], 1
    %367 = vsyncpa %s366, 1
    %368 = vsyncpa [#allocation6], 1
    %369 = vsyncpa [#allocation4], 1
    %s370 = scalar_lea.sflag [#allocation4], 1
    %371 = vsyncpa %s370, 1

// kernel: tpu_custom_call.1
$region0: #{tpu_custom_call.1}
  #allocation0 [shape = 'u32[]', space=smem, size = 0x4, offset = 0x4, fixed_abs, tag = 'smem constant byte address 0x4 - core index']
  #allocation1 [shape = 'u32[144,128]{1,0:T(1,128)}', space=vmem, size = 0x12000, scoped, tag = 'internal scratch']
  %s0 = inlined_call_operand.hbm [shape: bf16[40,64], index: 0, kind: input, shape index: {}]
  %s1 = inlined_call_operand.hbm [shape: bf16[64,128], index: 1, kind: input, shape index: {}]
  %s2 = inlined_call_operand.vmem [shape: f32[1,128], index: 2, kind: input, shape index: {}]
  %s3 = inlined_call_operand.hbm [shape: f32[40,128], index: 3, kind: output, shape index: {}]
  %s4 = sld [smem:[#allocation0]]
  $region53: #{tpu_custom_call.1} parent=0
    _
  %s6 = ssub.s32 1, %s4
  %s7 = scalar_select 0, %s6, %s4
  $region1: #{tpu_custom_call.1} parent=0
    #allocation2 [shape = 'u8[8192]{0}', space=vmem, size = 0x2000, scoped, tag = 'input window, operand 0']
    #allocation3 [shape = 's32[2]{0}', space=sflag, size = 0x8, scoped, tag = 'scoped memory for tpu_custom_call.1']
    #allocation4 [shape = 's32[2]{0}', space=sflag, size = 0x8, scoped, tag = 'scoped memory for tpu_custom_call.1']
    #allocation5 [shape = 'u8[16384]{0}', space=vmem, size = 0x4000, scoped, tag = 'input window, operand 1, single buffered']
    #allocation6 [shape = 's32[1]{0}', space=sflag, size = 0x4, scoped, tag = 'scoped memory for tpu_custom_call.1']
    #allocation7 [shape = 'u8[16384]{0}', space=vmem, size = 0x4000, scoped, tag = 'output window, operand 0']
    %8 = vsyncpa [#allocation3], 0
    %s9 = scalar_lea.sflag [#allocation3], 1
    %10 = vsyncpa %s9, 0
    %11 = vsyncpa [#allocation6], 0
    %12 = vsyncpa [#allocation4], 0
    %s13 = scalar_lea.sflag [#allocation4], 1
    %14 = vsyncpa %s13, 0
    loop: start=0, step=1, limit=5
    $region2: #{tpu_custom_call.1} parent=1 // loop_pre_header
      _
    $region3: #{tpu_custom_call.1} parent=1 // loop_header
      %s16 = sphi 0, %s20
      %p17 = scmp.ge.s32.totalorder %s16, 5
      %s26 = sphi 0, %s28
      %s29 = sphi 0, %s26
      %s30 = sphi 0, %s29
      %s46 = sphi 0, %s30
      %s50 = sphi 0, %s50
      %s52 = sphi 0, %s50
      %s53 = sphi 0, %s52
      %s67 = sphi 0, %s53
      %s71 = sphi 0, %s71
      %s73 = sphi 0, %s71
      %s74 = sphi 0, %s73
      %s88 = sphi 0, %s74
      %s94 = sphi 0, %s96
      %s97 = sphi 0, %s94
      %s98 = sphi 0, %s97
      %s114 = sphi 0, %s98
    $region4: #{tpu_custom_call.1} parent=1 // loop_header_branch
      %19 = sbr.rel (%p17) target = $region8
    $region5: #{tpu_custom_call.1} parent=1 // loop_body
      %s21 = ssub.s32 %s16, 1
      %s22 = ssub.s32 %s16, 2
      %s23 = sadd.s32 %s16, 1
      %s24 = ssub.s32 %s16, %s23
      %p25 = scmp.eq.s32.totalorder %s24, 0
      %s27 = sadd.s32 %s26, 1
      %s28 = scalar_select %p25, %s26, %s27
      %p31 = pneg %p25
      %p32 = scmp.eq.s32.totalorder %s16, 2
      %p33 = por %p31, %p32
      %p34 = scmp.ne.s32.totalorder %s26, %s29
      %p35 = scmp.eq.s32.totalorder %s16, 0
      %p36 = por %p34, %p35
      %p37 = scmp.ne.s32.totalorder %s26, %s29
      %p38 = scmp.eq.s32.totalorder %s21, 2
      %p39 = por %p37, %p38
      %p40 = scmp.ne.s32.totalorder %s29, %s30
      %p41 = scmp.eq.s32.totalorder %s21, 0
      %p42 = por %p40, %p41
      %p43 = scmp.ne.s32.totalorder %s29, %s30
      %p44 = scmp.eq.s32.totalorder %s22, 2
      %p45 = por %p43, %p44
      %p47 = scmp.ne.s32.totalorder %s30, %s46
      %p48 = scmp.eq.s32.totalorder %s22, 0
      %p49 = por %p47, %p48
      %s51 = sadd.s32 %s50, 1
      %p54 = scmp.eq.s32.totalorder %s16, 2
      %p55 = scmp.ne.s32.totalorder %s50, %s52
      %p56 = scmp.eq.s32.totalorder %s16, 0
      %p57 = por %p55, %p56
      %p58 = scmp.ne.s32.totalorder %s50, %s52
      %p59 = scmp.eq.s32.totalorder %s21, 2
      %p60 = por %p58, %p59
      %p61 = scmp.ne.s32.totalorder %s52, %s53
      %p62 = scmp.eq.s32.totalorder %s21, 0
      %p63 = por %p61, %p62
      %p64 = scmp.ne.s32.totalorder %s52, %s53
      %p65 = scmp.eq.s32.totalorder %s22, 2
      %p66 = por %p64, %p65
      %p68 = scmp.ne.s32.totalorder %s53, %s67
      %p69 = scmp.eq.s32.totalorder %s22, 0
      %p70 = por %p68, %p69
      %s72 = sadd.s32 %s71, 1
      %p75 = scmp.eq.s32.totalorder %s16, 2
      %p76 = scmp.ne.s32.totalorder %s71, %s73
      %p77 = scmp.eq.s32.totalorder %s16, 0
      %p78 = por %p76, %p77
      %p79 = scmp.ne.s32.totalorder %s71, %s73
      %p80 = scmp.eq.s32.totalorder %s21, 2
      %p81 = por %p79, %p80
      %p82 = scmp.ne.s32.totalorder %s73, %s74
      %p83 = scmp.eq.s32.totalorder %s21, 0
      %p84 = por %p82, %p83
      %p85 = scmp.ne.s32.totalorder %s73, %s74
      %p86 = scmp.eq.s32.totalorder %s22, 2
      %p87 = por %p85, %p86
      %p89 = scmp.ne.s32.totalorder %s74, %s88
      %p90 = scmp.eq.s32.totalorder %s22, 0
      %p91 = por %p89, %p90
      %s92 = ssub.s32 %s16, %s23
      %p93 = scmp.eq.s32.totalorder %s92, 0
      %s95 = sadd.s32 %s94, 1
      %s96 = scalar_select %p93, %s94, %s95
      %p99 = pneg %p93
      %p100 = scmp.eq.s32.totalorder %s16, 2
      %p101 = por %p99, %p100
      %p102 = scmp.ne.s32.totalorder %s94, %s97
      %p103 = scmp.eq.s32.totalorder %s16, 0
      %p104 = por %p102, %p103
      %p105 = scmp.ne.s32.totalorder %s94, %s97
      %p106 = scmp.eq.s32.totalorder %s21, 2
      %p107 = por %p105, %p106
      %p108 = scmp.ne.s32.totalorder %s97, %s98
      %p109 = scmp.eq.s32.totalorder %s21, 0
      %p110 = por %p108, %p109
      %p111 = scmp.ne.s32.totalorder %s97, %s98
      %p112 = scmp.eq.s32.totalorder %s22, 2
      %p113 = por %p111, %p112
      %p115 = scmp.ne.s32.totalorder %s98, %s114
      %p116 = scmp.eq.s32.totalorder %s22, 0
      %p117 = por %p115, %p116
      %p118 = scmp.le.s32.totalorder 1, %s16
      %p119 = scmp.lt.s32.totalorder %s16, 4
      %p120 = pnand %p118, %p119
      %p121 = pneg %p120
      // Predicated region
      $region9: #{tpu_custom_call.1} parent=5 // pred_check
        _
      $region10: #{tpu_custom_call.1} parent=5 // pred_check_branch
        %123 = sbr.rel (%p120) target = $region12
      $region11: #{tpu_custom_call.1} parent=5 // pred_region
        %s124 = ssub.s32 %s16, 1
        // Predicated region
        $region13: #{tpu_custom_call.1} parent=11 // pred_check
          %p125 = pneg %p63
        $region14: #{tpu_custom_call.1} parent=11 // pred_check_branch
          %127 = sbr.rel (%p125) target = $region16
        $region15: #{tpu_custom_call.1} parent=11 // pred_region
          %s129 = ssub.s32 512, 512
          %130 = vsyncadd [#allocation6], %s129
          %s131 = sshll.u32 [#allocation5], 4
          %s132 = int_to_ptr.vmem [resolvable:$true] %s131
          %137 = dma.hbm_to_vmem [thread:$0]  %s1, 512, %s132, [#allocation6], 64, 64, 4
        $region16: #{tpu_custom_call.1} parent=11 // pred_fallthru
          _
        // Predicated region
        $region17: #{tpu_custom_call.1} parent=11 // pred_check
          %p138 = pneg %p84
        $region18: #{tpu_custom_call.1} parent=11 // pred_check_branch
          %140 = sbr.rel (%p138) target = $region20
        $region19: #{tpu_custom_call.1} parent=11 // pred_region
          _
        $region20: #{tpu_custom_call.1} parent=11 // pred_fallthru
          _
      $region12: #{tpu_custom_call.1} parent=5 // pred_fallthru
        _
      %p141 = scmp.lt.s32.totalorder %s16, 3
      // Predicated region
      $region21: #{tpu_custom_call.1} parent=5 // pred_check
        %p142 = pneg %p141
      $region22: #{tpu_custom_call.1} parent=5 // pred_check_branch
        %144 = sbr.rel (%p142) target = $region24
      $region23: #{tpu_custom_call.1} parent=5 // pred_region
        // Predicated region
        $region25: #{tpu_custom_call.1} parent=23 // pred_check
          %p145 = pneg %p36
        $region26: #{tpu_custom_call.1} parent=23 // pred_check_branch
          %147 = sbr.rel (%p145) target = $region28
        $region27: #{tpu_custom_call.1} parent=23 // pred_region
          %s148 = sand.u32 %s26, 1
          %s149 = scalar_lea.sflag [#allocation3], %s148
          %s150 = sand.u32 %s26, 1
          %s151 = smul.addr %s150, 8
          %s152 = scalar_lea.vmem [#allocation2], %s151
          %s153 = smul.u32 2, %s16
          %s154 = ssub.s32 5, %s153
          %p155 = scmp.lt.s32.totalorder %s154, 2
          %s156 = scalar_select %p155, %s154, 2
          %s157 = smul.u32 64, %s156
          %s159 = ssub.s32 128, %s157
          %160 = vsyncadd %s149, %s159
          %p161 = scmp.ne.s32.totalorder 0, %s157
          %s162 = smul.addr %s153, 64
          %s163 = scalar_lea.hbm %s0, %s162
          %s164 = smul.u32 4, %s156
          %s165 = sshll.u32 %s152, 4
          %s166 = int_to_ptr.vmem [resolvable:$true] %s165
          %s167 = sshll.u32 %s164, 4
          %171 = dma.hbm_to_vmem [thread:$0]  (%p161), %s163, %s167, %s166, %s149, 64, 64, 4
        $region28: #{tpu_custom_call.1} parent=23 // pred_fallthru
          _
      $region24: #{tpu_custom_call.1} parent=5 // pred_fallthru
        _
      %p172 = scmp.le.s32.totalorder 1, %s16
      %p173 = scmp.lt.s32.totalorder %s16, 4
      %p174 = pnand %p172, %p173
      %p175 = pneg %p174
      // Predicated region
      $region29: #{tpu_custom_call.1} parent=5 // pred_check
        _
      $region30: #{tpu_custom_call.1} parent=5 // pred_check_branch
        %177 = sbr.rel (%p174) target = $region32
      $region31: #{tpu_custom_call.1} parent=5 // pred_region
        %s178 = ssub.s32 %s16, 1
        %s179 = sand.u32 %s29, 1
        %s180 = scalar_lea.sflag [#allocation3], %s179
        %s181 = sand.u32 %s29, 1
        %s182 = smul.addr %s181, 8
        %s183 = scalar_lea.vmem [#allocation2], %s182
        // Predicated region
        $region33: #{tpu_custom_call.1} parent=31 // pred_check
          %p184 = pneg %p42
        $region34: #{tpu_custom_call.1} parent=31 // pred_check_branch
          %186 = sbr.rel (%p184) target = $region36
        $region35: #{tpu_custom_call.1} parent=31 // pred_region
          %187 = dma.done %s180, 128
        $region36: #{tpu_custom_call.1} parent=31 // pred_fallthru
          _
        // Predicated region
        $region37: #{tpu_custom_call.1} parent=31 // pred_check
          %p188 = pneg %p63
        $region38: #{tpu_custom_call.1} parent=31 // pred_check_branch
          %190 = sbr.rel (%p188) target = $region40
        $region39: #{tpu_custom_call.1} parent=31 // pred_region
          %191 = dma.done [#allocation6], 512
        $region40: #{tpu_custom_call.1} parent=31 // pred_fallthru
          _
        %s192 = sand.u32 %s29, 1
        %s193 = scalar_lea.sflag [#allocation3], %s192
        %s194 = sand.u32 %s29, 1
        %s195 = smul.addr %s194, 8
        %s196 = scalar_lea.vmem [#allocation2], %s195
        %p197 = pneg %p42
        %p198 = pneg %p39
        %p199 = pneg %p63
        %p200 = pneg %p60
        %p201 = pneg %p84
        %p202 = pneg %p81
        %p203 = pneg %p110
        %p204 = pneg %p107
        %s205 = sand.u32 %s97, 1
        %s206 = scalar_lea.sflag [#allocation4], %s205
        %s207 = sand.u32 %s97, 1
        %s208 = smul.addr %s207, 16
        %s209 = scalar_lea.vmem [#allocation7], %s208
        %s210 = smul.u32 2, %s21
        %s211 = ssub.s32 5, %s210
        %p212 = scmp.lt.s32.totalorder %s211, 2
        %s213 = scalar_select %p212, %s211, 2
        %s214 = smul.u32 64, %s213
        %s215 = smul.u32 2, %s21
        %s216 = ssub.s32 5, %s215
        %p217 = scmp.lt.s32.totalorder %s216, 2
        %s218 = scalar_select %p217, %s216, 2
        %s219 = smul.u32 128, %s218
        %v221 = vld [vmem:[%s183] sm:$0xf]
        %v222 = vld [vmem:[%s183 + $0x4] sm:$0xf]
        %v223 = vld [vmem:[#allocation5] sm:$0xf]
        %v224 = vld [vmem:[#allocation5 + $0x4] sm:$0xf]
        %v225 = vld [vmem:[#allocation5 + $0x8] sm:$0xf]
        %v226 = vld [vmem:[#allocation5 + $0xc] sm:$0xf]
        %v227 = vld [vmem:[#allocation5 + $0x10] sm:$0xf]
        %v228 = vld [vmem:[#allocation5 + $0x14] sm:$0xf]
        %v229 = vld [vmem:[#allocation5 + $0x18] sm:$0xf]
        %v230 = vld [vmem:[#allocation5 + $0x1c] sm:$0xf]
        %v231 = vld [vmem:[%s2] sm:$0x1]
        %v233 = vlaneseq
        %v234 = vshrl.u32 %v233, 7
        %v235 = vsub.s32 0, %v234
        %v236 = vrot.slane %v231, %v235
        %v240 = vunpack.c.l.b16 %v221
        %v241 = vunpack.c.l.b16 %v222
        %v242 = vpack.c.b16 %v241, %v240
        %v251 = vunpack.c.l.b16 %v223
        %v252 = vunpack.c.l.b16 %v224
        %v253 = vunpack.c.l.b16 %v225
        %v254 = vunpack.c.l.b16 %v226
        %v255 = vunpack.c.l.b16 %v227
        %v256 = vunpack.c.l.b16 %v228
        %v257 = vunpack.c.l.b16 %v229
        %v258 = vunpack.c.l.b16 %v230
        %v259 = vpack.c.b16 %v252, %v251
        %v260 = vpack.c.b16 %v254, %v253
        %v261 = vpack.c.b16 %v256, %v255
        %v262 = vpack.c.b16 %v258, %v257
        %vm267 = vcmask 523264
        %v269 = vsel %vm267, %v242, 0
        %271 = vmatprep.subr.bf16.mxu0 0
        %272 = vmatpush1.bf16.msra.mxu0 %v259
        %273 = vmatprep.subr.bf16.mxu0 0
        %274 = vmatpush1.bf16.msra.mxu0 %v260
        %275 = vmatprep.subr.bf16.mxu0 0
        %276 = vmatpush1.bf16.msra.mxu0 %v261
        %277 = vmatprep.subr.bf16.mxu0 0
        %278 = vmatpush1.bf16.msra.mxu0 %v262
        %279 = vmatprep.subr.bf16.mxu0 0
        %280 = vmatpush1.bf16.msra.mxu0 0
        %281 = vmatprep.subr.bf16.mxu0 0
        %282 = vmatpush1.bf16.msra.mxu0 0
        %283 = vmatprep.subr.bf16.mxu0 0
        %284 = vmatpush1.bf16.msra.mxu0 0
        %285 = vmatprep.subr.bf16.mxu0 0
        %286 = vmatpush1.bf16.msra.mxu0 0
        %287 = vmatprep.subr.bf16.mxu0 0
        %288 = vmatpush1.bf16.msra.mxu0 0
        %289 = vmatprep.subr.bf16.mxu0 0
        %290 = vmatpush1.bf16.msra.mxu0 0
        %291 = vmatprep.subr.bf16.mxu0 0
        %292 = vmatpush1.bf16.msra.mxu0 0
        %293 = vmatprep.subr.bf16.mxu0 0
        %294 = vmatpush1.bf16.msra.mxu0 0
        %295 = vmatprep.subr.bf16.mxu0 0
        %296 = vmatpush1.bf16.msra.mxu0 0
        %297 = vmatprep.subr.bf16.mxu0 0
        %298 = vmatpush1.bf16.msra.mxu0 0
        %299 = vmatprep.subr.bf16.mxu0 0
        %300 = vmatpush1.bf16.msra.mxu0 0
        %301 = vmatprep.subr.bf16.mxu0 0
        %302 = vmatpush1.bf16.msra.mxu0 0
        %303 = vmatprep.mubr.bf16.mxu0 0
        %304 = vmatmul.mubr.bf16.gmra.mrb[0].mxu0 %v269
        %v305 = vpop.f32.mrb[0].mxu0
        %v306 = vadd.f32 %v236, %v305
        %v307 = vpop.f32.mrb[0].mxu0
        %v308 = vpop.f32.mrb[0].mxu0
        %v309 = vadd.f32 %v236, %v308
        %v310 = vpop.f32.mrb[0].mxu0
        %311 = vdwg.mxu0
        %v312 = vmul.f32 %v306, %v306
        %v313 = vmul.f32 %v309, %v309
        %314 = vadd.xlane.f32.xlu0 %v312
        %v315 = vpop.xlane.xlu0 %314
        %316 = vadd.xlane.f32.xlu0 %v313
        %v317 = vpop.xlane.xlu0 %316
        %v318 = vrsqrt.pop %v315
        %v319 = vrsqrt.pop %v317
        %v320 = vmul.f32 %v306, %v318
        %v321 = vmul.f32 %v309, %v319
        %322 = vst [vmem:[%s209] sm:$0xff] %v320
        %323 = vst [vmem:[%s209 + $0x8] sm:$0xff] %v321
        %s324 = sand.u32 %s97, 1
        %s325 = scalar_lea.sflag [#allocation4], %s324
        %s326 = sand.u32 %s97, 1
        %s327 = smul.addr %s326, 16
        %s328 = scalar_lea.vmem [#allocation7], %s327
        // Predicated region
        $region41: #{tpu_custom_call.1} parent=31 // pred_check
          %p329 = pneg %p107
        $region42: #{tpu_custom_call.1} parent=31 // pred_check_branch
          %331 = sbr.rel (%p329) target = $region44
        $region43: #{tpu_custom_call.1} parent=31 // pred_region
          %s332 = smul.u32 2, %s21
          %s333 = ssub.s32 5, %s332
          %p334 = scmp.lt.s32.totalorder %s333, 2
          %s335 = scalar_select %p334, %s333, 2
          %s336 = smul.u32 128, %s335
          %s338 = ssub.s32 256, %s336
          %339 = vsyncadd %s325, %s338
          %p340 = scmp.ne.s32.totalorder 0, %s336
          %s341 = smul.addr %s332, 128
          %s342 = scalar_lea.hbm %s3, %s341
          %s343 = smul.u32 8, %s335
          %s344 = sshll.u32 %s328, 4
          %s345 = int_to_ptr.vmem [resolvable:$true] %s344
          %s346 = sshll.u32 %s343, 4
          %350 = dma.vmem_to_hbm [thread:$0]  (%p340), %s345, %s346, %s342, %s325, 128, 128, 8
        $region44: #{tpu_custom_call.1} parent=31 // pred_fallthru
          _
      $region32: #{tpu_custom_call.1} parent=5 // pred_fallthru
        _
      %p351 = scmp.le.s32.totalorder 2, %s16
      // Predicated region
      $region45: #{tpu_custom_call.1} parent=5 // pred_check
        %p352 = pneg %p351
      $region46: #{tpu_custom_call.1} parent=5 // pred_check_branch
        %354 = sbr.rel (%p352) target = $region48
      $region47: #{tpu_custom_call.1} parent=5 // pred_region
        %s355 = ssub.s32 %s16, 2
        // Predicated region
        $region49: #{tpu_custom_call.1} parent=47 // pred_check
          %p356 = pneg %p113
        $region50: #{tpu_custom_call.1} parent=47 // pred_check_branch
          %358 = sbr.rel (%p356) target = $region52
        $region51: #{tpu_custom_call.1} parent=47 // pred_region
          %s359 = sand.u32 %s98, 1
          %s360 = scalar_lea.sflag [#allocation4], %s359
          %s361 = sand.u32 %s98, 1
          %s362 = smul.addr %s361, 16
          %s363 = scalar_lea.vmem [#allocation7], %s362
          %364 = dma.done %s360, 256
        $region52: #{tpu_custom_call.1} parent=47 // pred_fallthru
          _
      $region48: #{tpu_custom_call.1} parent=5 // pred_fallthru
        _
    $region6: #{tpu_custom_call.1} parent=1 // loop_footer
      %s20 = sadd.s32 1, %s16
    $region7: #{tpu_custom_call.1} parent=1 // loop_footer_branch
      %15 = sbr.rel target = $region3
    $region8: #{tpu_custom_call.1} parent=1 // loop_exit
      _
    %365 = vsyncpa [#allocation3], 1
    %s366 = scalar_lea.sflag [#allocation3], 1
    %367 = vsyncpa %s366, 1
    %368 = vsyncpa [#allocation6], 1
    %369 = vsyncpa [#allocation4], 1
    %s370 = scalar_lea.sflag [#allocation4], 1
    %371 = vsyncpa %s370, 1

</llo_original>
